<compile_context>
chip_gen: v5e
topology: v5e:2x2
jax: 0.10.0
libtpu: 0.0.40
codegen_flags: <defaults>
</compile_context>

<pallas_src>
import functools

import jax
import jax.numpy as jnp
from jax.experimental import pallas as pl
from jax.experimental.pallas import tpu as pltpu

LANES = 128           # vreg lane width (last dim)
SUBLANES = 8          # vreg sublane height
MAX_TILE_ROWS = 1024  # (1024,128) f32 block = 512 KiB; safe on v5e/v6e/v7x


def _focal_loss_kernel(x_ref, t_ref, partial_ref, *, gamma, eps, total,
                       need_mask):
    i = pl.program_id(0)

    x = x_ref[...].astype(jnp.float32)
    t = t_ref[...].astype(jnp.float32)

    # input.clamp(eps, 1 - eps)  (also keeps any pad / OOB garbage finite)
    x = jnp.clip(x, eps, 1.0 - eps)
    one_minus_x = 1.0 - x
    log_x = jnp.log(x)
    log_1mx = jnp.log(one_minus_x)

    if float(gamma) == int(gamma):
        g = int(gamma)
        pow_1mx = one_minus_x ** g        # integer_pow -> VPU multiplies
        pow_x = x ** g
    else:
        # reuse the logs we already have: 2 EUP exps instead of 4
        pow_1mx = jnp.exp(gamma * log_1mx)
        pow_x = jnp.exp(gamma * log_x)

    # -(t * (1-x)^g * log(x) + (1-t) * x^g * log(1-x))   (soft targets ok)
    loss = -(t * pow_1mx * log_x + (1.0 - t) * pow_x * log_1mx)

    tr, lc = loss.shape

    def partial_sum(v):
        # (tr, 128) -> (tr//8, 8, 128) -> sum over slabs: pure vreg adds,
        # no XLU cross-lane work per step.
        return v.reshape(tr // SUBLANES, SUBLANES, lc).sum(axis=0)

    if need_mask:
        is_last = i == pl.num_programs(0) - 1

        @pl.when(jnp.logical_not(is_last))
        def _():
            partial_ref[...] = partial_sum(loss)

        @pl.when(is_last)
        def _():
            # mask off flat indices >= total (wrapper pad + ragged OOB rows)
            row = i * tr + jax.lax.broadcasted_iota(jnp.int32, (tr, lc), 0)
            col = jax.lax.broadcasted_iota(jnp.int32, (tr, lc), 1)
            full_rows = total // lc       # static Python ints
            rem_cols = total % lc
            valid = (row < full_rows) | ((row == full_rows) & (col < rem_cols))
            partial_ref[...] = partial_sum(jnp.where(valid, loss, 0.0))
    else:
        partial_ref[...] = partial_sum(loss)


@functools.partial(jax.jit, static_argnums=(2, 3))
def focal_loss(inputs, targets, gamma=2, eps=1e-3):
    """Mean focal loss matching PyTorch FocalLoss.forward semantics."""
    total = int(inputs.size)
    x = jnp.ravel(inputs)
    t = jnp.ravel(targets)
    if t.dtype == jnp.bool_:
        t = t.astype(jnp.int8)            # keep HBM traffic narrow

    # Pad at most one (8,128) sublane tile so the 2-D reshape below is a free
    # view and tile heights stay multiples of 8.  When total % 1024 == 0
    # (typical image tensors) this path is copy-free.
    tile_elems = SUBLANES * LANES
    padded = pl.cdiv(total, tile_elems) * tile_elems
    pad = padded - total
    if pad:
        # pad values are masked in-kernel; 0.5 keeps the logs finite.
        x = jnp.concatenate([x, jnp.full((pad,), 0.5, x.dtype)])
        t = jnp.concatenate([t, jnp.zeros((pad,), t.dtype)])

    rows = padded // LANES
    x2 = x.reshape(rows, LANES)
    t2 = t.reshape(rows, LANES)

    tile_rows = min(MAX_TILE_ROWS, rows)  # multiple of 8 by construction
    n_tiles = pl.cdiv(rows, tile_rows)    # last block may be ragged (masked)
    need_mask = (n_tiles * tile_rows * LANES) != total

    kernel = functools.partial(_focal_loss_kernel, gamma=gamma,
                               eps=float(eps), total=total,
                               need_mask=need_mask)

    partials = pl.pallas_call(
        kernel,
        out_shape=jax.ShapeDtypeStruct((n_tiles, SUBLANES, LANES), jnp.float32),
        grid_spec=pltpu.PrefetchScalarGridSpec(
            num_scalar_prefetch=0,
            grid=(n_tiles,),
            in_specs=[
                pl.BlockSpec((tile_rows, LANES), lambda i: (i, 0)),
                pl.BlockSpec((tile_rows, LANES), lambda i: (i, 0)),
            ],
            out_specs=pl.BlockSpec((None, SUBLANES, LANES),
                                   lambda i: (i, 0, 0)),
        ),
        compiler_params=pltpu.CompilerParams(
            dimension_semantics=("parallel",)),
    )(x2, t2)

    # single cross-lane reduction + mean, once, outside the kernel
    return jnp.sum(partials) / jnp.float32(total)


def focal_loss_ref(inputs, targets, gamma=2, eps=1e-3):
    x = jnp.clip(inputs.astype(jnp.float32), eps, 1.0 - eps)
    t = targets.astype(jnp.float32)
    loss = -(t * (1.0 - x) ** gamma * jnp.log(x)
             + (1.0 - t) * x ** gamma * jnp.log(1.0 - x))
    return jnp.mean(loss)


if __name__ == "__main__":
    key = jax.random.PRNGKey(0)
    k1, k2 = jax.random.split(key)

    # small NCHW prediction/target pair (sigmoid probs + binary mask)
    x = jax.random.uniform(k1, (2, 4, 16, 16), dtype=jnp.float32)
    t = (jax.random.uniform(k2, (2, 4, 16, 16)) > 0.5).astype(jnp.float32)
    out = focal_loss(x, t)
    jax.block_until_ready(out)
    ref = focal_loss_ref(x, t)
    assert jnp.allclose(out, ref, rtol=1e-4, atol=1e-6), (out, ref)

    # extra validation: odd total (pad + mask path) and multi-tile ragged grid
    for seed, shape in [(1, (3, 5, 7, 11)), (2, (2, 12, 128, 96))]:
        ka, kb = jax.random.split(jax.random.PRNGKey(seed))
        xa = jax.random.uniform(ka, shape, dtype=jnp.float32)
        ta = (jax.random.uniform(kb, shape) > 0.5).astype(jnp.float32)
        got = focal_loss(xa, ta)
        jax.block_until_ready(got)
        want = focal_loss_ref(xa, ta)
        assert jnp.allclose(got, want, rtol=1e-4, atol=1e-6), (shape, got, want)

    print("KERNEL_OK")
</pallas_src>

<mosaic_0001>
module attributes {stable_mosaic.version = 11 : i64} {
  func.func @_focal_loss_kernel(%arg0: i32, %arg1: memref<16x128xf32, #tpu.memory_space<vmem>>, %arg2: memref<16x128xf32, #tpu.memory_space<vmem>>, %arg3: memref<1x8x128xf32, #tpu.memory_space<vmem>>) attributes {dimension_semantics = [#tpu.dimension_semantics<parallel>], iteration_bounds = array<i64: 1>, scalar_prefetch = 0 : i64, scratch_operands = 0 : i64, tpu.core_type = #tpu.core_type<tc>, window_params = [{transform_indices = @transform_0, window_bounds = array<i64: 16, 128>}, {transform_indices = @transform_1, window_bounds = array<i64: 16, 128>}, {transform_indices = @transform_2, window_bounds = array<i64: 1, 8, 128>}]} {
    %c0 = arith.constant 0 : index
    %c0_0 = arith.constant 0 : index
    %0 = vector.load %arg1[%c0, %c0_0] : memref<16x128xf32, #tpu.memory_space<vmem>>, vector<16x128xf32>
    %c0_1 = arith.constant 0 : index
    %c0_2 = arith.constant 0 : index
    %1 = vector.load %arg2[%c0_1, %c0_2] : memref<16x128xf32, #tpu.memory_space<vmem>>, vector<16x128xf32>
    %cst = arith.constant 1.000000e-03 : f32
    %cst_3 = arith.constant 9.990000e-01 : f32
    %2 = vector.broadcast %cst : f32 to vector<16x128xf32>
    %3 = arith.maximumf %2, %0 : vector<16x128xf32>
    %4 = vector.broadcast %cst_3 : f32 to vector<16x128xf32>
    %5 = arith.minimumf %4, %3 : vector<16x128xf32>
    %cst_4 = arith.constant 1.000000e+00 : f32
    %6 = vector.broadcast %cst_4 : f32 to vector<16x128xf32>
    %7 = arith.subf %6, %5 : vector<16x128xf32>
    %8 = math.log %5 : vector<16x128xf32>
    %9 = math.log %7 : vector<16x128xf32>
    %10 = arith.mulf %7, %7 : vector<16x128xf32>
    %11 = arith.mulf %5, %5 : vector<16x128xf32>
    %12 = arith.mulf %1, %10 : vector<16x128xf32>
    %13 = arith.mulf %12, %8 : vector<16x128xf32>
    %cst_5 = arith.constant 1.000000e+00 : f32
    %14 = vector.broadcast %cst_5 : f32 to vector<16x128xf32>
    %15 = arith.subf %14, %1 : vector<16x128xf32>
    %16 = arith.mulf %15, %11 : vector<16x128xf32>
    %17 = arith.mulf %16, %9 : vector<16x128xf32>
    %18 = arith.addf %13, %17 : vector<16x128xf32>
    %cst_6 = arith.constant 0.000000e+00 : f32
    %19 = vector.broadcast %cst_6 : f32 to vector<16x128xf32>
    %20 = arith.subf %19, %18 : vector<16x128xf32>
    %21 = vector.shape_cast %20 : vector<16x128xf32> to vector<2x8x128xf32>
    %cst_7 = arith.constant dense<0.000000e+00> : vector<8x128xf32>
    %22 = vector.multi_reduction <add>, %21, %cst_7 [0] : vector<2x8x128xf32> to vector<8x128xf32>
    %c0_8 = arith.constant 0 : index
    %c0_9 = arith.constant 0 : index
    %c0_10 = arith.constant 0 : index
    %23 = vector.load %arg3[%c0_8, %c0_9, %c0_10] : memref<1x8x128xf32, #tpu.memory_space<vmem>>, vector<1x8x128xf32>
    %24 = vector.shape_cast %23 : vector<1x8x128xf32> to vector<8x128xf32>
    %25 = vector.shape_cast %22 : vector<8x128xf32> to vector<1x8x128xf32>
    tpu.vector_store %arg3[%c0_8, %c0_9, %c0_10], %25 {strides = array<i32>} : memref<1x8x128xf32, #tpu.memory_space<vmem>>, vector<1x8x128xf32>,
    return
  }
  func.func @transform_0(%arg0: i32) -> (i32, i32) {
    %c0_i32 = arith.constant 0 : i32
    %c0_i32_0 = arith.constant 0 : i32
    return %arg0, %c0_i32 : i32, i32
  }
  func.func @transform_1(%arg0: i32) -> (i32, i32) {
    %c0_i32 = arith.constant 0 : i32
    %c0_i32_0 = arith.constant 0 : i32
    return %arg0, %c0_i32 : i32, i32
  }
  func.func @transform_2(%arg0: i32) -> (i32, i32, i32) {
    %c0_i32 = arith.constant 0 : i32
    %c0_i32_0 = arith.constant 0 : i32
    %c0_i32_1 = arith.constant 0 : i32
    return %arg0, %c0_i32, %c0_i32_0 : i32, i32, i32
  }
}

</mosaic_0001>

<llo_original>
// kernel: focal_loss.1
$region0: #{focal_loss.1}
  #allocation0 [shape = 'u32[]', space=smem, size = 0x4, offset = 0x4, fixed_abs, tag = 'smem constant byte address 0x4 - core index']
  #allocation1 [shape = 'u32[72,128]{1,0:T(1,128)}', space=vmem, size = 0x9000, scoped, tag = 'internal scratch']
  %s0 = inlined_call_operand.vmem [shape: f32[16,128], index: 0, kind: input, shape index: {}]
  %s1 = inlined_call_operand.vmem [shape: f32[16,128], index: 1, kind: input, shape index: {}]
  %s2 = inlined_call_operand.vmem [shape: f32[1,8,128], index: 2, kind: output, shape index: {}]
  %s3 = sld [smem:[#allocation0]]
  $region18: #{focal_loss.1} parent=0
    _
  %s5 = ssub.s32 1, %s3
  %s6 = scalar_select 0, %s5, %s3
  // Predicated region
  $region2: #{focal_loss.1} parent=0 // pred_check
    _
  $region3: #{focal_loss.1} parent=0 // pred_check_branch
    %8 = sbr.rel (0) target = $region5
  $region4: #{focal_loss.1} parent=0 // pred_region
    _
  $region5: #{focal_loss.1} parent=0 // pred_fallthru
    _
  // Predicated region
  $region6: #{focal_loss.1} parent=0 // pred_check
    _
  $region7: #{focal_loss.1} parent=0 // pred_check_branch
    %10 = sbr.rel (0) target = $region9
  $region8: #{focal_loss.1} parent=0 // pred_region
    _
  $region9: #{focal_loss.1} parent=0 // pred_fallthru
    _
  %v11 = vld [vmem:[%s0] sm:$0xff]
  %v12 = vld [vmem:[%s0 + $0x8] sm:$0xff]
  %v13 = vld [vmem:[%s1] sm:$0xff]
  %v14 = vld [vmem:[%s1 + $0x8] sm:$0xff]
  %v15 = vmax.f32 %v11, 0.001
  %v16 = vmax.f32 %v12, 0.001
  %v17 = vmin.f32 %v15, 0.999
  %v18 = vmin.f32 %v16, 0.999
  %v19 = vsub.f32 1.0, %v17
  %v20 = vsub.f32 1.0, %v18
  %v21 = vlog2.pop %v17
  %v22 = vmul.f32 %v21, 0.6931472
  %v23 = vlog2.pop %v18
  %v24 = vmul.f32 %v23, 0.6931472
  %v25 = vlog2.pop %v19
  %v26 = vmul.f32 %v25, 0.6931472
  %v27 = vlog2.pop %v20
  %v28 = vmul.f32 %v27, 0.6931472
  %v29 = vmul.f32 %v19, %v19
  %v30 = vmul.f32 %v20, %v20
  %v31 = vmul.f32 %v17, %v17
  %v32 = vmul.f32 %v18, %v18
  %v33 = vmul.f32 %v13, %v29
  %v34 = vmul.f32 %v14, %v30
  %v35 = vmul.f32 %v33, %v22
  %v36 = vmul.f32 %v34, %v24
  %v37 = vsub.f32 1.0, %v13
  %v38 = vsub.f32 1.0, %v14
  %v39 = vmul.f32 %v37, %v31
  %v40 = vmul.f32 %v38, %v32
  %v41 = vmul.f32 %v39, %v26
  %v42 = vmul.f32 %v40, %v28
  %v43 = vadd.f32 %v35, %v41
  %v44 = vadd.f32 %v36, %v42
  %v45 = vsub.f32 0.0, %v43
  %v46 = vsub.f32 0.0, %v44
  %v47 = vadd.f32 %v45, %v46
  %48 = vst [vmem:[%s2] sm:$0xff] %v47
  // Predicated region
  $region10: #{focal_loss.1} parent=0 // pred_check
    _
  $region11: #{focal_loss.1} parent=0 // pred_check_branch
    %50 = sbr.rel (0) target = $region13
  $region12: #{focal_loss.1} parent=0 // pred_region
    _
  $region13: #{focal_loss.1} parent=0 // pred_fallthru
    _
  // Predicated region
  $region14: #{focal_loss.1} parent=0 // pred_check
    _
  $region15: #{focal_loss.1} parent=0 // pred_check_branch
    %52 = sbr.rel (0) target = $region17
  $region16: #{focal_loss.1} parent=0 // pred_region
    _
  $region17: #{focal_loss.1} parent=0 // pred_fallthru
    _

</llo_original>
